<compile_context>
chip_gen: v7x
topology: tpu7x:2x2x1
jax: 0.10.0
libtpu: 0.0.40
codegen_flags: <defaults>
</compile_context>

<pallas_src>
import jax
import jax.numpy as jnp
from jax.experimental import pallas as pl
from jax.experimental.pallas import tpu as pltpu


def _cdiv(a, b):
    return -(-a // b)


def _round_up(x, m):
    return _cdiv(x, m) * m


def _vmem_budget_bytes():
    """Per-generation usable VMEM budget (leaves headroom below physical)."""
    phys = 64 << 20  # conservative default: v7x has 64 MiB per TensorCore
    try:
        info = pltpu.get_tpu_info()
        phys = int(getattr(info, "vmem_capacity_bytes", phys))
    except Exception:
        pass
    if phys <= (64 << 20):
        return 48 << 20   # v7x: leave headroom for Mosaic internal scratch/semaphores
    return 100 << 20      # v5e / v6e: 128 MiB physical


# --------------------------------------------------------------------------- #
# Kernels
# --------------------------------------------------------------------------- #
def _csl_kernel(x_ref, w_ref, gb_ref, o_ref):
    """Resident-weight path.

    x_ref:  (TB, TM, K)   streaming input tile
    w_ref:  (K, N)        pre-transposed layer weight (resident, constant index_map)
    gb_ref: (TB, 2, N)    row 0 = gate, row 1 = combined bias (f32)
    o_ref:  (TB, TM, N)
    """
    tb, tm, k = x_ref.shape
    n = w_ref.shape[-1]
    w = w_ref[...]
    gate = gb_ref[:, 0:1, :]
    bias = gb_ref[:, 1:2, :]
    if tb == 1 or tm % 8 == 0:
        # Merge (TB, TM) -> TB*TM rows: one big MXU matmul per step.
        y = jnp.dot(x_ref[...].reshape(tb * tm, k), w,
                    preferred_element_type=jnp.float32).reshape(tb, tm, n)
        o_ref[...] = (y * gate + bias).astype(o_ref.dtype)
    else:
        for b in range(tb):  # static unroll; only for tiny, oddly-shaped S
            y = jnp.dot(x_ref[b], w, preferred_element_type=jnp.float32)
            o_ref[b] = (y * gate[b] + bias[b]).astype(o_ref.dtype)


def _csl_kernel_ktiled(x_ref, w_ref, gb_ref, o_ref, acc_ref):
    """K-tiled fallback: grid axis 2 walks dim_in; f32 accumulator in VMEM scratch."""
    k_idx = pl.program_id(2)
    tb, tm, tk = x_ref.shape
    n = w_ref.shape[-1]

    @pl.when(k_idx == 0)
    def _():
        acc_ref[...] = jnp.zeros_like(acc_ref)

    w = w_ref[...]
    if tb == 1 or tm % 8 == 0:
        acc_ref[...] += jnp.dot(x_ref[...].reshape(tb * tm, tk), w,
                                preferred_element_type=jnp.float32).reshape(tb, tm, n)
    else:
        for b in range(tb):
            acc_ref[b] += jnp.dot(x_ref[b], w, preferred_element_type=jnp.float32)

    @pl.when(k_idx == pl.num_programs(2) - 1)
    def _():
        gate = gb_ref[:, 0:1, :]
        bias = gb_ref[:, 1:2, :]
        o_ref[...] = (acc_ref[...] * gate + bias).astype(o_ref.dtype)


# --------------------------------------------------------------------------- #
# Wrapper
# --------------------------------------------------------------------------- #
def concat_scale_linear(context, x, params, *, compute_dtype=jnp.bfloat16,
                        out_dtype=None, tile_m=None, k_tile=None,
                        vmem_budget_bytes=None):
    """context: (B, 1+dim_c); x: (B, S, dim_in) or (B, dim_in); returns matching output."""
    squeeze_seq = x.ndim == 2
    if squeeze_seq:
        x = x[:, None, :]
    B, S, dim_in = x.shape
    dim_out = params["w_layer"].shape[0]
    if out_dtype is None:
        out_dtype = x.dtype

    # ---- hoisted context GEMMs (O(B * dim_c * dim_out); trivial in XLA) -------
    f32 = jnp.float32
    ctx = context.astype(f32)
    gate = ctx @ params["w_gate"].astype(f32).T + params["b_gate"].astype(f32)
    hbias = ctx @ params["w_hbias"].astype(f32).T
    cbias = params["b_layer"].astype(f32)[None, :] * gate + hbias   # exact bias fold
    gb = jnp.stack([gate, cbias], axis=1)                           # (B, 2, dim_out) f32

    # ---- operands: no seq / K / N padding; bf16 MXU inputs by default ---------
    w = params["w_layer"].T                                         # (dim_in, dim_out)
    if compute_dtype is not None:
        w = w.astype(compute_dtype)
        if x.dtype != compute_dtype:
            x = x.astype(compute_dtype)
    x_item = jnp.dtype(x.dtype).itemsize
    w_item = jnp.dtype(w.dtype).itemsize
    o_item = jnp.dtype(out_dtype).itemsize

    budget = _vmem_budget_bytes() if vmem_budget_bytes is None else int(vmem_budget_bytes)

    # ---- resident weight vs. K-tiled fallback ---------------------------------
    w_bytes = dim_in * dim_out * w_item
    use_k_tiling = (k_tile is not None) or (2 * w_bytes > budget // 2)
    if use_k_tiling:
        tk = _round_up(max(int(k_tile) if k_tile is not None else 512, 128), 128)
        while 2 * tk * dim_out * w_item > budget // 2 and tk > 128:
            tk = max(128, (tk // 2) // 128 * 128)
        dim_in_p = _round_up(dim_in, tk)
        if dim_in_p != dim_in:                 # zero K-pad is exact; large-K case only
            x = jnp.pad(x, ((0, 0), (0, 0), (0, dim_in_p - dim_in)))
            w = jnp.pad(w, ((0, dim_in_p - dim_in), (0, 0)))
        num_k = dim_in_p // tk
        w_buf_bytes = 2 * tk * dim_out * w_item
    else:
        tk = dim_in
        num_k = 1
        w_buf_bytes = 2 * w_bytes              # Buffered(1) halves this when supported
    # TODO(synk): add an N (dim_out) grid axis for extremely large dim_out as well.

    # ---- tile geometry from the per-generation VMEM budget --------------------
    headroom = 2 << 20
    avail = max(budget - w_buf_bytes - headroom, 1 << 20)
    per_row = (2 * tk * x_item + 2 * dim_out * o_item
               + (dim_out * 4 if use_k_tiling else 0))

    if S <= 128:
        # Small-S regime: keep the whole sequence per step and pack batches.
        TM = S
        TB = max(1, min(B, avail // max(per_row * TM, 1)))
    else:
        TB = 1
        if tile_m is not None:
            TM = max(8, _round_up(int(tile_m), 8))
        else:
            TM = max(8, min(2048, (avail // max(per_row, 1)) // 8 * 8))
        if TM >= S:
            TM = S
    # v7x has 2 TensorCores sharded over "parallel" axes: give them >= 2 steps.
    if _cdiv(B, TB) * _cdiv(S, TM) < 2:
        if TB > 1:
            TB = _cdiv(TB, 2)
        elif S >= 16:
            TM = _round_up(_cdiv(S, 2), 8)

    grid_b, grid_m = _cdiv(B, TB), _cdiv(S, TM)

    cost = pl.CostEstimate(                    # true (unpadded) flops / bytes
        flops=2 * B * S * dim_in * dim_out,
        transcendentals=0,
        bytes_accessed=(B * S * dim_in * x_item + dim_in * dim_out * w_item
                        + gb.size * 4 + B * S * dim_out * o_item),
    )
    need = (2 * TB * TM * tk * x_item + 2 * TB * TM * dim_out * o_item
            + w_buf_bytes + 2 * TB * 2 * dim_out * 4
            + (TB * TM * dim_out * 4 if use_k_tiling else 0))
    vmem_limit = int(min(budget, max(need + (4 << 20), 16 << 20)))

    out_shape = jax.ShapeDtypeStruct((B, S, dim_out), out_dtype)

    def _call(single_buffer_weight):
        if use_k_tiling:
            grid = (grid_b, grid_m, num_k)
            in_specs = [
                pl.BlockSpec((TB, TM, tk), lambda b, m, k: (b, m, k)),
                pl.BlockSpec((tk, dim_out), lambda b, m, k: (k, 0)),
                pl.BlockSpec((TB, 2, dim_out), lambda b, m, k: (b, 0, 0)),
            ]
            out_specs = pl.BlockSpec((TB, TM, dim_out), lambda b, m, k: (b, m, 0))
            scratch = [pltpu.VMEM((TB, TM, dim_out), jnp.float32)]
            kernel = _csl_kernel_ktiled
            dims = ("parallel", "parallel", "arbitrary")
        else:
            w_block = (dim_in, dim_out)
            if single_buffer_weight and hasattr(pl, "Buffered"):
                # Constant index_map -> double-buffering the weight is pure VMEM waste.
                w_spec = pl.BlockSpec(w_block, lambda b, m: (0, 0),
                                      pipeline_mode=pl.Buffered(1))
            else:
                w_spec = pl.BlockSpec(w_block, lambda b, m: (0, 0))
            grid = (grid_b, grid_m)
            in_specs = [
                pl.BlockSpec((TB, TM, dim_in), lambda b, m: (b, m, 0)),
                w_spec,
                pl.BlockSpec((TB, 2, dim_out), lambda b, m: (b, 0, 0)),
            ]
            out_specs = pl.BlockSpec((TB, TM, dim_out), lambda b, m: (b, m, 0))
            scratch = []
            kernel = _csl_kernel
            dims = ("parallel", "parallel")
        return pl.pallas_call(
            kernel,
            out_shape=out_shape,
            grid_spec=pltpu.PrefetchScalarGridSpec(
                num_scalar_prefetch=0,
                grid=grid,
                in_specs=in_specs,
                out_specs=out_specs,
                scratch_shapes=scratch,
            ),
            compiler_params=pltpu.CompilerParams(
                dimension_semantics=dims,
                vmem_limit_bytes=vmem_limit,
            ),
            cost_estimate=cost,
        )(x, w, gb)

    if use_k_tiling:
        out = _call(False)
    else:
        try:
            out = _call(True)
        except Exception:
            # pipeline_mode / pl.Buffered(1) not supported on this jax: plain spec.
            out = _call(False)

    return out[:, 0, :] if squeeze_seq else out


# --------------------------------------------------------------------------- #
# Reference + init
# --------------------------------------------------------------------------- #
def init_params(key, dim_in, dim_out, dim_c, dtype=jnp.float32):
    """Mimics PyTorch nn.Linear default init (uniform +-1/sqrt(fan_in))."""
    ks = jax.random.split(key, 5)
    u = lambda k, shape, fan_in: jax.random.uniform(
        k, shape, dtype, minval=-1.0 / (fan_in ** 0.5), maxval=1.0 / (fan_in ** 0.5))
    return {
        "w_layer": u(ks[0], (dim_out, dim_in), dim_in),
        "b_layer": u(ks[1], (dim_out,), dim_in),
        "w_gate":  u(ks[2], (dim_out, 1 + dim_c), 1 + dim_c),
        "b_gate":  u(ks[3], (dim_out,), 1 + dim_c),
        "w_hbias": u(ks[4], (dim_out, 1 + dim_c), 1 + dim_c),
    }


def concat_scale_linear_ref(context, x, params):
    gate = context @ params["w_gate"].T + params["b_gate"]
    hbias = context @ params["w_hbias"].T
    y = x @ params["w_layer"].T + params["b_layer"]
    if x.ndim == 3:
        gate = gate[:, None, :]
        hbias = hbias[:, None, :]
    return y * gate + hbias


if __name__ == "__main__":
    key = jax.random.PRNGKey(0)
    k_ctx, k_x, k_p, k_x2, k_p2 = jax.random.split(key, 5)

    # -- Case 1: default bf16 MXU-operand path, resident weight, small-S batching.
    B, S, dim_in, dim_out, dim_c = 2, 8, 32, 32, 4
    context = jax.random.normal(k_ctx, (B, 1 + dim_c), jnp.float32)
    x = jax.random.normal(k_x, (B, S, dim_in), jnp.float32)
    params = init_params(k_p, dim_in, dim_out, dim_c)
    ref = concat_scale_linear_ref(context, x, params)

    out = jax.block_until_ready(concat_scale_linear(context, x, params))
    assert out.shape == (B, S, dim_out)
    assert jnp.allclose(out, ref, atol=1e-1, rtol=1e-1), "bf16 path mismatch"

    # -- Case 2: f32 operands (tolerance also covers a bf16-pass MXU default).
    out_f32 = jax.block_until_ready(
        concat_scale_linear(context, x, params, compute_dtype=jnp.float32))
    assert jnp.allclose(out_f32, ref, atol=5e-2, rtol=5e-2), "f32 path mismatch"

    # -- Case 3: the module's 2-D x branch (no sequence dim).
    x2d = x[:, 0, :]
    ref2d = concat_scale_linear_ref(context, x2d, params)
    out2d = jax.block_until_ready(concat_scale_linear(context, x2d, params))
    assert out2d.shape == (B, dim_out)
    assert jnp.allclose(out2d, ref2d, atol=1e-1, rtol=1e-1), "2-D path mismatch"

    # -- Case 4: exercise the K-tiled fallback (forced small k_tile, 2 K steps).
    dim_in_big, S_big = 256, 24
    x_big = jax.random.normal(k_x2, (B, S_big, dim_in_big), jnp.float32)
    params_big = init_params(k_p2, dim_in_big, dim_out, dim_c)
    ref_big = concat_scale_linear_ref(context, x_big, params_big)
    out_big = jax.block_until_ready(
        concat_scale_linear(context, x_big, params_big, k_tile=128))
    assert out_big.shape == (B, S_big, dim_out)
    assert jnp.allclose(out_big, ref_big, atol=1e-1, rtol=1e-1), "K-tiled path mismatch"

    print("KERNEL_OK")
</pallas_src>

<mosaic_0001>
module attributes {stable_mosaic.version = 11 : i64} {
  func.func @_csl_kernel(%arg0: i32, %arg1: i32, %arg2: memref<1x8x32xbf16, #tpu.memory_space<vmem>>, %arg3: memref<32x32xbf16, #tpu.memory_space<vmem>>, %arg4: memref<1x2x32xf32, #tpu.memory_space<vmem>>, %arg5: memref<1x8x32xf32, #tpu.memory_space<vmem>>) attributes {dimension_semantics = [#tpu.dimension_semantics<parallel>, #tpu.dimension_semantics<parallel>], iteration_bounds = array<i64: 2, 1>, scalar_prefetch = 0 : i64, scratch_operands = 0 : i64, tpu.core_type = #tpu.core_type<tc>, window_params = [{transform_indices = @transform_0, window_bounds = array<i64: 1, 8, 32>}, {pipeline_mode = #tpu.pipeline_mode<synchronous>, transform_indices = @transform_1, window_bounds = array<i64: 32, 32>}, {transform_indices = @transform_2, window_bounds = array<i64: 1, 2, 32>}, {transform_indices = @transform_3, window_bounds = array<i64: 1, 8, 32>}]} {
    %c0 = arith.constant 0 : index
    %c0_0 = arith.constant 0 : index
    %0 = vector.load %arg3[%c0, %c0_0] : memref<32x32xbf16, #tpu.memory_space<vmem>>, vector<32x32xbf16>
    %c0_1 = arith.constant 0 : index
    %c0_2 = arith.constant 0 : index
    %c0_3 = arith.constant 0 : index
    %1 = vector.load %arg4[%c0_1, %c0_2, %c0_3] : memref<1x2x32xf32, #tpu.memory_space<vmem>>, vector<1x1x32xf32>
    %c0_4 = arith.constant 0 : index
    %c1 = arith.constant 1 : index
    %c0_5 = arith.constant 0 : index
    %2 = vector.load %arg4[%c0_4, %c1, %c0_5] : memref<1x2x32xf32, #tpu.memory_space<vmem>>, vector<1x1x32xf32>
    %c0_6 = arith.constant 0 : index
    %c0_7 = arith.constant 0 : index
    %c0_8 = arith.constant 0 : index
    %3 = vector.load %arg2[%c0_6, %c0_7, %c0_8] : memref<1x8x32xbf16, #tpu.memory_space<vmem>>, vector<1x8x32xbf16>
    %4 = vector.shape_cast %3 : vector<1x8x32xbf16> to vector<8x32xbf16>
    %cst = arith.constant dense<0.000000e+00> : vector<8x32xf32>
    %5 = tpu.matmul %4, %0, %cst {dimension_numbers = #tpu.dot_dimension_numbers<[1], [0], [0], [1], [0, 0, 1, 1], [], []>} : vector<8x32xbf16>, vector<32x32xbf16>, vector<8x32xf32> -> vector<8x32xf32>
    %6 = vector.shape_cast %5 : vector<8x32xf32> to vector<1x8x32xf32>
    %7 = vector.broadcast %1 : vector<1x1x32xf32> to vector<1x8x32xf32>
    %8 = arith.mulf %6, %7 : vector<1x8x32xf32>
    %9 = vector.broadcast %2 : vector<1x1x32xf32> to vector<1x8x32xf32>
    %10 = arith.addf %8, %9 : vector<1x8x32xf32>
    %c0_9 = arith.constant 0 : index
    %c0_10 = arith.constant 0 : index
    %c0_11 = arith.constant 0 : index
    %11 = vector.load %arg5[%c0_9, %c0_10, %c0_11] : memref<1x8x32xf32, #tpu.memory_space<vmem>>, vector<1x8x32xf32>
    tpu.vector_store %arg5[%c0_9, %c0_10, %c0_11], %10 {strides = array<i32>} : memref<1x8x32xf32, #tpu.memory_space<vmem>>, vector<1x8x32xf32>,
    return
  }
  func.func @transform_0(%arg0: i32, %arg1: i32) -> (i32, i32, i32) {
    %c0_i32 = arith.constant 0 : i32
    %c0_i32_0 = arith.constant 0 : i32
    return %arg0, %arg1, %c0_i32 : i32, i32, i32
  }
  func.func @transform_1(%arg0: i32, %arg1: i32) -> (i32, i32) {
    %c0_i32 = arith.constant 0 : i32
    %c0_i32_0 = arith.constant 0 : i32
    %c0_i32_1 = arith.constant 0 : i32
    return %c0_i32, %c0_i32_0 : i32, i32
  }
  func.func @transform_2(%arg0: i32, %arg1: i32) -> (i32, i32, i32) {
    %c0_i32 = arith.constant 0 : i32
    %c0_i32_0 = arith.constant 0 : i32
    %c0_i32_1 = arith.constant 0 : i32
    return %arg0, %c0_i32, %c0_i32_0 : i32, i32, i32
  }
  func.func @transform_3(%arg0: i32, %arg1: i32) -> (i32, i32, i32) {
    %c0_i32 = arith.constant 0 : i32
    %c0_i32_0 = arith.constant 0 : i32
    return %arg0, %arg1, %c0_i32 : i32, i32, i32
  }
}

module attributes {stable_mosaic.version = 11 : i64} {
  func.func @_csl_kernel(%arg0: i32, %arg1: i32, %arg2: memref<1x8x32xbf16, #tpu.memory_space<vmem>>, %arg3: memref<32x32xbf16, #tpu.memory_space<vmem>>, %arg4: memref<1x2x32xf32, #tpu.memory_space<vmem>>, %arg5: memref<1x8x32xf32, #tpu.memory_space<vmem>>) attributes {dimension_semantics = [#tpu.dimension_semantics<parallel>, #tpu.dimension_semantics<parallel>], iteration_bounds = array<i64: 2, 1>, scalar_prefetch = 0 : i64, scratch_operands = 0 : i64, tpu.core_type = #tpu.core_type<tc>, window_params = [{transform_indices = @transform_0, window_bounds = array<i64: 1, 8, 32>}, {pipeline_mode = #tpu.pipeline_mode<synchronous>, transform_indices = @transform_1, window_bounds = array<i64: 32, 32>}, {transform_indices = @transform_2, window_bounds = array<i64: 1, 2, 32>}, {transform_indices = @transform_3, window_bounds = array<i64: 1, 8, 32>}]} {
    %c0 = arith.constant 0 : index
    %c0_0 = arith.constant 0 : index
    %0 = vector.load %arg3[%c0, %c0_0] : memref<32x32xbf16, #tpu.memory_space<vmem>>, vector<32x32xbf16>
    %c0_1 = arith.constant 0 : index
    %c0_2 = arith.constant 0 : index
    %c0_3 = arith.constant 0 : index
    %1 = vector.load %arg4[%c0_1, %c0_2, %c0_3] : memref<1x2x32xf32, #tpu.memory_space<vmem>>, vector<1x1x32xf32>
    %c0_4 = arith.constant 0 : index
    %c1 = arith.constant 1 : index
    %c0_5 = arith.constant 0 : index
    %2 = vector.load %arg4[%c0_4, %c1, %c0_5] : memref<1x2x32xf32, #tpu.memory_space<vmem>>, vector<1x1x32xf32>
    %c0_6 = arith.constant 0 : index
    %c0_7 = arith.constant 0 : index
    %c0_8 = arith.constant 0 : index
    %3 = vector.load %arg2[%c0_6, %c0_7, %c0_8] : memref<1x8x32xbf16, #tpu.memory_space<vmem>>, vector<1x8x32xbf16>
    %4 = vector.shape_cast %3 : vector<1x8x32xbf16> to vector<8x32xbf16>
    %cst = arith.constant dense<0.000000e+00> : vector<8x32xf32>
    %5 = tpu.matmul %4, %0, %cst {dimension_numbers = #tpu.dot_dimension_numbers<[1], [0], [0], [1], [0, 0, 1, 1], [], []>} : vector<8x32xbf16>, vector<32x32xbf16>, vector<8x32xf32> -> vector<8x32xf32>
    %6 = vector.shape_cast %5 : vector<8x32xf32> to vector<1x8x32xf32>
    %7 = vector.broadcast %1 : vector<1x1x32xf32> to vector<1x8x32xf32>
    %8 = arith.mulf %6, %7 : vector<1x8x32xf32>
    %9 = vector.broadcast %2 : vector<1x1x32xf32> to vector<1x8x32xf32>
    %10 = arith.addf %8, %9 : vector<1x8x32xf32>
    %c0_9 = arith.constant 0 : index
    %c0_10 = arith.constant 0 : index
    %c0_11 = arith.constant 0 : index
    %11 = vector.load %arg5[%c0_9, %c0_10, %c0_11] : memref<1x8x32xf32, #tpu.memory_space<vmem>>, vector<1x8x32xf32>
    tpu.vector_store %arg5[%c0_9, %c0_10, %c0_11], %10 {strides = array<i32>} : memref<1x8x32xf32, #tpu.memory_space<vmem>>, vector<1x8x32xf32>,
    return
  }
  func.func @transform_0(%arg0: i32, %arg1: i32) -> (i32, i32, i32) {
    %c0_i32 = arith.constant 0 : i32
    %c0_i32_0 = arith.constant 0 : i32
    return %arg0, %arg1, %c0_i32 : i32, i32, i32
  }
  func.func @transform_1(%arg0: i32, %arg1: i32) -> (i32, i32) {
    %c0_i32 = arith.constant 0 : i32
    %c0_i32_0 = arith.constant 0 : i32
    %c0_i32_1 = arith.constant 0 : i32
    return %c0_i32, %c0_i32_0 : i32, i32
  }
  func.func @transform_2(%arg0: i32, %arg1: i32) -> (i32, i32, i32) {
    %c0_i32 = arith.constant 0 : i32
    %c0_i32_0 = arith.constant 0 : i32
    %c0_i32_1 = arith.constant 0 : i32
    return %arg0, %c0_i32, %c0_i32_0 : i32, i32, i32
  }
  func.func @transform_3(%arg0: i32, %arg1: i32) -> (i32, i32, i32) {
    %c0_i32 = arith.constant 0 : i32
    %c0_i32_0 = arith.constant 0 : i32
    return %arg0, %arg1, %c0_i32 : i32, i32, i32
  }
}

</mosaic_0001>

<llo_original>
// kernel: tpu_custom_call.1
$region0: #{tpu_custom_call.1}
  #allocation0 [shape = 'u32[]', space=smem, size = 0x4, offset = 0x4, fixed_abs, tag = 'smem constant byte address 0x4 - core index']
  #allocation1 [shape = 'u32[144,128]{1,0:T(1,128)}', space=vmem, size = 0x12000, scoped, tag = 'internal scratch']
  %s0 = inlined_call_operand.hbm [shape: bf16[2,8,32], index: 0, kind: input, shape index: {}]
  %s1 = inlined_call_operand.hbm [shape: bf16[32,32], index: 1, kind: input, shape index: {}]
  %s2 = inlined_call_operand.vmem [shape: f32[2,2,32], index: 2, kind: input, shape index: {}]
  %s3 = inlined_call_operand.hbm [shape: f32[2,8,32], index: 3, kind: output, shape index: {}]
  %s4 = sld [smem:[#allocation0]]
  $region53: #{tpu_custom_call.1} parent=0
    _
  %s6 = ssub.s32 1, %s4
  %s7 = scalar_select 0, %s6, %s4
  $region1: #{tpu_custom_call.1} parent=0
    #allocation2 [shape = 'u8[4096]{0}', space=vmem, size = 0x1000, scoped, tag = 'input window, operand 0']
    #allocation3 [shape = 's32[2]{0}', space=sflag, size = 0x8, scoped, tag = 'scoped memory for tpu_custom_call.1']
    #allocation4 [shape = 's32[2]{0}', space=sflag, size = 0x8, scoped, tag = 'scoped memory for tpu_custom_call.1']
    #allocation5 [shape = 'u8[8192]{0}', space=vmem, size = 0x2000, scoped, tag = 'input window, operand 1, single buffered']
    #allocation6 [shape = 's32[1]{0}', space=sflag, size = 0x4, scoped, tag = 'scoped memory for tpu_custom_call.1']
    #allocation7 [shape = 'u8[8192]{0}', space=vmem, size = 0x2000, scoped, tag = 'output window, operand 0']
    %8 = vsyncpa [#allocation3], 0
    %s9 = scalar_lea.sflag [#allocation3], 1
    %10 = vsyncpa %s9, 0
    %11 = vsyncpa [#allocation6], 0
    %12 = vsyncpa [#allocation4], 0
    %s13 = scalar_lea.sflag [#allocation4], 1
    %14 = vsyncpa %s13, 0
    loop: start=0, step=1, limit=4
    $region2: #{tpu_custom_call.1} parent=1 // loop_pre_header
      _
    $region3: #{tpu_custom_call.1} parent=1 // loop_header
      %s16 = sphi 0, %s20
      %p17 = scmp.ge.s32.totalorder %s16, 4
      %s23 = sphi 0, %s35
      %s24 = sphi 0, %s31
      %s25 = sphi 0, %s23
      %s26 = sphi 0, %s24
      %s27 = sphi 0, %s25
      %s28 = sphi 0, %s26
      %s40 = sphi 0, %s42
      %s43 = sphi 0, %s40
      %s44 = sphi 0, %s43
      %s60 = sphi 0, %s44
      %s64 = sphi 0, %s64
      %s66 = sphi 0, %s64
      %s67 = sphi 0, %s66
      %s81 = sphi 0, %s67
      %s87 = sphi 0, %s89
      %s90 = sphi 0, %s87
      %s91 = sphi 0, %s90
      %s107 = sphi 0, %s91
      %s115 = sphi 0, %s117
      %s118 = sphi 0, %s115
      %s119 = sphi 0, %s118
      %s135 = sphi 0, %s119
    $region4: #{tpu_custom_call.1} parent=1 // loop_header_branch
      %19 = sbr.rel (%p17) target = $region8
    $region5: #{tpu_custom_call.1} parent=1 // loop_body
      %s21 = ssub.s32 %s16, 1
      %s22 = ssub.s32 %s16, 2
      %s29 = sadd.s32 1, %s24
      %p30 = scmp.ge.s32.totalorder %s29, 1
      %s31 = scalar_select %p30, 0, %s29
      %s32 = sadd.s32 1, %s23
      %s33 = scalar_select %p30, %s32, %s23
      %p34 = scmp.ge.s32.totalorder %s33, 2
      %s35 = scalar_select %p34, 0, %s33
      %s36 = ssub.s32 %s23, %s35
      %s37 = ssub.s32 %s24, %s31
      %s38 = sor.u32 %s36, %s37
      %p39 = scmp.eq.s32.totalorder %s38, 0
      %s41 = sadd.s32 %s40, 1
      %s42 = scalar_select %p39, %s40, %s41
      %p45 = pneg %p39
      %p46 = scmp.eq.s32.totalorder %s16, 1
      %p47 = por %p45, %p46
      %p48 = scmp.ne.s32.totalorder %s40, %s43
      %p49 = scmp.eq.s32.totalorder %s16, 0
      %p50 = por %p48, %p49
      %p51 = scmp.ne.s32.totalorder %s40, %s43
      %p52 = scmp.eq.s32.totalorder %s21, 1
      %p53 = por %p51, %p52
      %p54 = scmp.ne.s32.totalorder %s43, %s44
      %p55 = scmp.eq.s32.totalorder %s21, 0
      %p56 = por %p54, %p55
      %p57 = scmp.ne.s32.totalorder %s43, %s44
      %p58 = scmp.eq.s32.totalorder %s22, 1
      %p59 = por %p57, %p58
      %p61 = scmp.ne.s32.totalorder %s44, %s60
      %p62 = scmp.eq.s32.totalorder %s22, 0
      %p63 = por %p61, %p62
      %s65 = sadd.s32 %s64, 1
      %p68 = scmp.eq.s32.totalorder %s16, 1
      %p69 = scmp.ne.s32.totalorder %s64, %s66
      %p70 = scmp.eq.s32.totalorder %s16, 0
      %p71 = por %p69, %p70
      %p72 = scmp.ne.s32.totalorder %s64, %s66
      %p73 = scmp.eq.s32.totalorder %s21, 1
      %p74 = por %p72, %p73
      %p75 = scmp.ne.s32.totalorder %s66, %s67
      %p76 = scmp.eq.s32.totalorder %s21, 0
      %p77 = por %p75, %p76
      %p78 = scmp.ne.s32.totalorder %s66, %s67
      %p79 = scmp.eq.s32.totalorder %s22, 1
      %p80 = por %p78, %p79
      %p82 = scmp.ne.s32.totalorder %s67, %s81
      %p83 = scmp.eq.s32.totalorder %s22, 0
      %p84 = por %p82, %p83
      %s85 = ssub.s32 %s23, %s35
      %p86 = scmp.eq.s32.totalorder %s85, 0
      %s88 = sadd.s32 %s87, 1
      %s89 = scalar_select %p86, %s87, %s88
      %p92 = pneg %p86
      %p93 = scmp.eq.s32.totalorder %s16, 1
      %p94 = por %p92, %p93
      %p95 = scmp.ne.s32.totalorder %s87, %s90
      %p96 = scmp.eq.s32.totalorder %s16, 0
      %p97 = por %p95, %p96
      %p98 = scmp.ne.s32.totalorder %s87, %s90
      %p99 = scmp.eq.s32.totalorder %s21, 1
      %p100 = por %p98, %p99
      %p101 = scmp.ne.s32.totalorder %s90, %s91
      %p102 = scmp.eq.s32.totalorder %s21, 0
      %p103 = por %p101, %p102
      %p104 = scmp.ne.s32.totalorder %s90, %s91
      %p105 = scmp.eq.s32.totalorder %s22, 1
      %p106 = por %p104, %p105
      %p108 = scmp.ne.s32.totalorder %s91, %s107
      %p109 = scmp.eq.s32.totalorder %s22, 0
      %p110 = por %p108, %p109
      %s111 = ssub.s32 %s23, %s35
      %s112 = ssub.s32 %s24, %s31
      %s113 = sor.u32 %s111, %s112
      %p114 = scmp.eq.s32.totalorder %s113, 0
      %s116 = sadd.s32 %s115, 1
      %s117 = scalar_select %p114, %s115, %s116
      %p120 = pneg %p114
      %p121 = scmp.eq.s32.totalorder %s16, 1
      %p122 = por %p120, %p121
      %p123 = scmp.ne.s32.totalorder %s115, %s118
      %p124 = scmp.eq.s32.totalorder %s16, 0
      %p125 = por %p123, %p124
      %p126 = scmp.ne.s32.totalorder %s115, %s118
      %p127 = scmp.eq.s32.totalorder %s21, 1
      %p128 = por %p126, %p127
      %p129 = scmp.ne.s32.totalorder %s118, %s119
      %p130 = scmp.eq.s32.totalorder %s21, 0
      %p131 = por %p129, %p130
      %p132 = scmp.ne.s32.totalorder %s118, %s119
      %p133 = scmp.eq.s32.totalorder %s22, 1
      %p134 = por %p132, %p133
      %p136 = scmp.ne.s32.totalorder %s119, %s135
      %p137 = scmp.eq.s32.totalorder %s22, 0
      %p138 = por %p136, %p137
      %p139 = scmp.le.s32.totalorder 1, %s16
      %p140 = scmp.lt.s32.totalorder %s16, 3
      %p141 = pnand %p139, %p140
      %p142 = pneg %p141
      // Predicated region
      $region9: #{tpu_custom_call.1} parent=5 // pred_check
        _
      $region10: #{tpu_custom_call.1} parent=5 // pred_check_branch
        %144 = sbr.rel (%p141) target = $region12
      $region11: #{tpu_custom_call.1} parent=5 // pred_region
        %s145 = ssub.s32 %s16, 1
        // Predicated region
        $region13: #{tpu_custom_call.1} parent=11 // pred_check
          %p146 = pneg %p77
        $region14: #{tpu_custom_call.1} parent=11 // pred_check_branch
          %148 = sbr.rel (%p146) target = $region16
        $region15: #{tpu_custom_call.1} parent=11 // pred_region
          %s150 = ssub.s32 256, 256
          %151 = vsyncadd [#allocation6], %s150
          %s152 = sshll.u32 [#allocation5], 4
          %s153 = int_to_ptr.vmem [resolvable:$true] %s152
          %158 = dma.hbm_to_vmem [thread:$0]  %s1, 256, %s153, [#allocation6], 64, 64, 4
        $region16: #{tpu_custom_call.1} parent=11 // pred_fallthru
          _
      $region12: #{tpu_custom_call.1} parent=5 // pred_fallthru
        _
      %p159 = scmp.lt.s32.totalorder %s16, 2
      // Predicated region
      $region17: #{tpu_custom_call.1} parent=5 // pred_check
        %p160 = pneg %p159
      $region18: #{tpu_custom_call.1} parent=5 // pred_check_branch
        %162 = sbr.rel (%p160) target = $region20
      $region19: #{tpu_custom_call.1} parent=5 // pred_region
        // Predicated region
        $region21: #{tpu_custom_call.1} parent=19 // pred_check
          %p163 = pneg %p50
        $region22: #{tpu_custom_call.1} parent=19 // pred_check_branch
          %165 = sbr.rel (%p163) target = $region24
        $region23: #{tpu_custom_call.1} parent=19 // pred_region
          %s166 = sand.u32 %s40, 1
          %s167 = scalar_lea.sflag [#allocation3], %s166
          %s168 = sand.u32 %s40, 1
          %s169 = smul.addr %s168, 4
          %s170 = scalar_lea.vmem [#allocation2], %s169
          %s172 = ssub.s32 64, 64
          %173 = vsyncadd %s167, %s172
          %s174 = sadd.s32 %s24, %s23
          %s175 = smul.addr %s174, 64
          %s176 = scalar_lea.hbm %s0, %s175
          %s178 = sshll.u32 %s170, 4
          %s179 = int_to_ptr.vmem [resolvable:$true] %s178
          %181 = dma.hbm_to_vmem [thread:$0]  %s176, 64, %s179, %s167
        $region24: #{tpu_custom_call.1} parent=19 // pred_fallthru
          _
        // Predicated region
        $region25: #{tpu_custom_call.1} parent=19 // pred_check
          %p182 = pneg %p97
        $region26: #{tpu_custom_call.1} parent=19 // pred_check_branch
          %184 = sbr.rel (%p182) target = $region28
        $region27: #{tpu_custom_call.1} parent=19 // pred_region
          %p185 = scmp.lt.s32.totalorder %s23, 1
          %s186 = scalar_select %p185, %s23, 1
          %s187 = smul.addr %s186, 2
          %s188 = scalar_lea.vmem %s2, %s187
        $region28: #{tpu_custom_call.1} parent=19 // pred_fallthru
          _
      $region20: #{tpu_custom_call.1} parent=5 // pred_fallthru
        _
      %p189 = scmp.le.s32.totalorder 1, %s16
      %p190 = scmp.lt.s32.totalorder %s16, 3
      %p191 = pnand %p189, %p190
      %p192 = pneg %p191
      // Predicated region
      $region29: #{tpu_custom_call.1} parent=5 // pred_check
        _
      $region30: #{tpu_custom_call.1} parent=5 // pred_check_branch
        %194 = sbr.rel (%p191) target = $region32
      $region31: #{tpu_custom_call.1} parent=5 // pred_region
        %s195 = ssub.s32 %s16, 1
        %s196 = sand.u32 %s43, 1
        %s197 = scalar_lea.sflag [#allocation3], %s196
        %s198 = sand.u32 %s43, 1
        %s199 = smul.addr %s198, 4
        %s200 = scalar_lea.vmem [#allocation2], %s199
        // Predicated region
        $region33: #{tpu_custom_call.1} parent=31 // pred_check
          %p201 = pneg %p56
        $region34: #{tpu_custom_call.1} parent=31 // pred_check_branch
          %203 = sbr.rel (%p201) target = $region36
        $region35: #{tpu_custom_call.1} parent=31 // pred_region
          %204 = dma.done %s197, 64
        $region36: #{tpu_custom_call.1} parent=31 // pred_fallthru
          _
        // Predicated region
        $region37: #{tpu_custom_call.1} parent=31 // pred_check
          %p205 = pneg %p77
        $region38: #{tpu_custom_call.1} parent=31 // pred_check_branch
          %207 = sbr.rel (%p205) target = $region40
        $region39: #{tpu_custom_call.1} parent=31 // pred_region
          %208 = dma.done [#allocation6], 256
        $region40: #{tpu_custom_call.1} parent=31 // pred_fallthru
          _
        %s209 = sand.u32 %s43, 1
        %s210 = scalar_lea.sflag [#allocation3], %s209
        %s211 = sand.u32 %s43, 1
        %s212 = smul.addr %s211, 4
        %s213 = scalar_lea.vmem [#allocation2], %s212
        %p214 = pneg %p56
        %p215 = pneg %p53
        %p216 = pneg %p77
        %p217 = pneg %p74
        %p218 = scmp.lt.s32.totalorder %s25, 1
        %s219 = scalar_select %p218, %s25, 1
        %s220 = smul.addr %s219, 2
        %s221 = scalar_lea.vmem %s2, %s220
        %p222 = pneg %p103
        %p223 = pneg %p100
        %p224 = pneg %p131
        %p225 = pneg %p128
        %s226 = sand.u32 %s118, 1
        %s227 = scalar_lea.sflag [#allocation4], %s226
        %s228 = sand.u32 %s118, 1
        %s229 = smul.addr %s228, 8
        %s230 = scalar_lea.vmem [#allocation7], %s229
        %p231 = scmp.lt.s32.totalorder %s25, 1
        %s232 = scalar_select %p231, %s25, 1
        %s233 = smul.addr %s232, 2
        %s234 = scalar_lea.vmem %s2, %s233
        %v236 = vld [vmem:[#allocation5] sm:$0xf]
        %v237 = vld [vmem:[#allocation5 + $0x4] sm:$0xf]
        %v238 = vld [vmem:[#allocation5 + $0x8] sm:$0xf]
        %v239 = vld [vmem:[#allocation5 + $0xc] sm:$0xf]
        %v240 = vld [vmem:[%s234] sm:$0x1]
        %v241 = vld [vmem:[%s234 + $0x1] sm:$0x1]
        %v242 = vld [vmem:[%s200] sm:$0xf]
        %v247 = vunpack.c.l.b16 %v236
        %v248 = vunpack.c.l.b16 %v237
        %v249 = vunpack.c.l.b16 %v238
        %v250 = vunpack.c.l.b16 %v239
        %v251 = vpack.c.b16 %v248, %v247
        %v252 = vpack.c.b16 %v250, %v249
        %vm255 = vcmask 261120
        %v257 = vsel %vm255, %v242, 0
        %259 = vmatprep.subr.bf16.mxu0 0
        %260 = vmatpush1.bf16.msra.mxu0 %v251
        %261 = vmatprep.subr.bf16.mxu0 0
        %262 = vmatpush1.bf16.msra.mxu0 %v252
        %263 = vmatprep.subr.bf16.mxu0 0
        %264 = vmatpush1.bf16.msra.mxu0 0
        %265 = vmatprep.subr.bf16.mxu0 0
        %266 = vmatpush1.bf16.msra.mxu0 0
        %267 = vmatprep.subr.bf16.mxu0 0
        %268 = vmatpush1.bf16.msra.mxu0 0
        %269 = vmatprep.subr.bf16.mxu0 0
        %270 = vmatpush1.bf16.msra.mxu0 0
        %271 = vmatprep.subr.bf16.mxu0 0
        %272 = vmatpush1.bf16.msra.mxu0 0
        %273 = vmatprep.subr.bf16.mxu0 0
        %274 = vmatpush1.bf16.msra.mxu0 0
        %275 = vmatprep.subr.bf16.mxu0 0
        %276 = vmatpush1.bf16.msra.mxu0 0
        %277 = vmatprep.subr.bf16.mxu0 0
        %278 = vmatpush1.bf16.msra.mxu0 0
        %279 = vmatprep.subr.bf16.mxu0 0
        %280 = vmatpush1.bf16.msra.mxu0 0
        %281 = vmatprep.subr.bf16.mxu0 0
        %282 = vmatpush1.bf16.msra.mxu0 0
        %283 = vmatprep.subr.bf16.mxu0 0
        %284 = vmatpush1.bf16.msra.mxu0 0
        %285 = vmatprep.subr.bf16.mxu0 0
        %286 = vmatpush1.bf16.msra.mxu0 0
        %287 = vmatprep.subr.bf16.mxu0 0
        %288 = vmatpush1.bf16.msra.mxu0 0
        %289 = vmatprep.subr.bf16.mxu0 0
        %290 = vmatpush1.bf16.msra.mxu0 0
        %291 = vmatprep.mubr.bf16.mxu0 0
        %292 = vmatmul.mubr.bf16.gmra.mrb[0].mxu0 %v257
        %v293 = vpop.f32.mrb[0].mxu0
        %v294 = vadd.f32 0.0, %v293
        %v295 = vpop.f32.mrb[0].mxu0
        %v296 = vpop.f32.mrb[0].mxu0
        %v297 = vpop.f32.mrb[0].mxu0
        %298 = vdwg.mxu0
        %v299 = vlaneseq
        %v300 = vshrl.u32 %v299, 7
        %v301 = vsub.s32 0, %v300
        %v302 = vrot.slane %v240, %v301
        %v303 = vmul.f32 %v294, %v302
        %v304 = vlaneseq
        %v305 = vshrl.u32 %v304, 7
        %v306 = vsub.s32 0, %v305
        %v307 = vrot.slane %v241, %v306
        %v308 = vadd.f32 %v303, %v307
        %309 = vst.msk [vmem:[%s230] sm:$0xff] %vm255, %v308
        %s310 = sand.u32 %s118, 1
        %s311 = scalar_lea.sflag [#allocation4], %s310
        %s312 = sand.u32 %s118, 1
        %s313 = smul.addr %s312, 8
        %s314 = scalar_lea.vmem [#allocation7], %s313
        // Predicated region
        $region41: #{tpu_custom_call.1} parent=31 // pred_check
          %p315 = pneg %p128
        $region42: #{tpu_custom_call.1} parent=31 // pred_check_branch
          %317 = sbr.rel (%p315) target = $region44
        $region43: #{tpu_custom_call.1} parent=31 // pred_region
          %s319 = ssub.s32 128, 128
          %320 = vsyncadd %s311, %s319
          %s321 = sadd.s32 %s26, %s25
          %s322 = smul.addr %s321, 128
          %s323 = scalar_lea.hbm %s3, %s322
          %s325 = sshll.u32 %s314, 4
          %s326 = int_to_ptr.vmem [resolvable:$true] %s325
          %328 = dma.vmem_to_hbm [thread:$0]  %s326, 128, %s323, %s311
        $region44: #{tpu_custom_call.1} parent=31 // pred_fallthru
          _
      $region32: #{tpu_custom_call.1} parent=5 // pred_fallthru
        _
      %p329 = scmp.le.s32.totalorder 2, %s16
      // Predicated region
      $region45: #{tpu_custom_call.1} parent=5 // pred_check
        %p330 = pneg %p329
      $region46: #{tpu_custom_call.1} parent=5 // pred_check_branch
        %332 = sbr.rel (%p330) target = $region48
      $region47: #{tpu_custom_call.1} parent=5 // pred_region
        %s333 = ssub.s32 %s16, 2
        // Predicated region
        $region49: #{tpu_custom_call.1} parent=47 // pred_check
          %p334 = pneg %p134
        $region50: #{tpu_custom_call.1} parent=47 // pred_check_branch
          %336 = sbr.rel (%p334) target = $region52
        $region51: #{tpu_custom_call.1} parent=47 // pred_region
          %s337 = sand.u32 %s119, 1
          %s338 = scalar_lea.sflag [#allocation4], %s337
          %s339 = sand.u32 %s119, 1
          %s340 = smul.addr %s339, 8
          %s341 = scalar_lea.vmem [#allocation7], %s340
          %342 = dma.done %s338, 128
        $region52: #{tpu_custom_call.1} parent=47 // pred_fallthru
          _
      $region48: #{tpu_custom_call.1} parent=5 // pred_fallthru
        _
    $region6: #{tpu_custom_call.1} parent=1 // loop_footer
      %s20 = sadd.s32 1, %s16
    $region7: #{tpu_custom_call.1} parent=1 // loop_footer_branch
      %15 = sbr.rel target = $region3
    $region8: #{tpu_custom_call.1} parent=1 // loop_exit
      _
    %343 = vsyncpa [#allocation3], 1
    %s344 = scalar_lea.sflag [#allocation3], 1
    %345 = vsyncpa %s344, 1
    %346 = vsyncpa [#allocation6], 1
    %347 = vsyncpa [#allocation4], 1
    %s348 = scalar_lea.sflag [#allocation4], 1
    %349 = vsyncpa %s348, 1

// kernel: tpu_custom_call.1
$region0: #{tpu_custom_call.1}
  #allocation0 [shape = 'u32[]', space=smem, size = 0x4, offset = 0x4, fixed_abs, tag = 'smem constant byte address 0x4 - core index']
  #allocation1 [shape = 'u32[144,128]{1,0:T(1,128)}', space=vmem, size = 0x12000, scoped, tag = 'internal scratch']
  %s0 = inlined_call_operand.hbm [shape: bf16[2,8,32], index: 0, kind: input, shape index: {}]
  %s1 = inlined_call_operand.hbm [shape: bf16[32,32], index: 1, kind: input, shape index: {}]
  %s2 = inlined_call_operand.vmem [shape: f32[2,2,32], index: 2, kind: input, shape index: {}]
  %s3 = inlined_call_operand.hbm [shape: f32[2,8,32], index: 3, kind: output, shape index: {}]
  %s4 = sld [smem:[#allocation0]]
  $region53: #{tpu_custom_call.1} parent=0
    _
  %s6 = ssub.s32 1, %s4
  %s7 = scalar_select 0, %s6, %s4
  $region1: #{tpu_custom_call.1} parent=0
    #allocation2 [shape = 'u8[4096]{0}', space=vmem, size = 0x1000, scoped, tag = 'input window, operand 0']
    #allocation3 [shape = 's32[2]{0}', space=sflag, size = 0x8, scoped, tag = 'scoped memory for tpu_custom_call.1']
    #allocation4 [shape = 's32[2]{0}', space=sflag, size = 0x8, scoped, tag = 'scoped memory for tpu_custom_call.1']
    #allocation5 [shape = 'u8[8192]{0}', space=vmem, size = 0x2000, scoped, tag = 'input window, operand 1, single buffered']
    #allocation6 [shape = 's32[1]{0}', space=sflag, size = 0x4, scoped, tag = 'scoped memory for tpu_custom_call.1']
    #allocation7 [shape = 'u8[8192]{0}', space=vmem, size = 0x2000, scoped, tag = 'output window, operand 0']
    %8 = vsyncpa [#allocation3], 0
    %s9 = scalar_lea.sflag [#allocation3], 1
    %10 = vsyncpa %s9, 0
    %11 = vsyncpa [#allocation6], 0
    %12 = vsyncpa [#allocation4], 0
    %s13 = scalar_lea.sflag [#allocation4], 1
    %14 = vsyncpa %s13, 0
    loop: start=0, step=1, limit=4
    $region2: #{tpu_custom_call.1} parent=1 // loop_pre_header
      _
    $region3: #{tpu_custom_call.1} parent=1 // loop_header
      %s16 = sphi 0, %s20
      %p17 = scmp.ge.s32.totalorder %s16, 4
      %s23 = sphi 0, %s35
      %s24 = sphi 0, %s31
      %s25 = sphi 0, %s23
      %s26 = sphi 0, %s24
      %s27 = sphi 0, %s25
      %s28 = sphi 0, %s26
      %s40 = sphi 0, %s42
      %s43 = sphi 0, %s40
      %s44 = sphi 0, %s43
      %s60 = sphi 0, %s44
      %s64 = sphi 0, %s64
      %s66 = sphi 0, %s64
      %s67 = sphi 0, %s66
      %s81 = sphi 0, %s67
      %s87 = sphi 0, %s89
      %s90 = sphi 0, %s87
      %s91 = sphi 0, %s90
      %s107 = sphi 0, %s91
      %s115 = sphi 0, %s117
      %s118 = sphi 0, %s115
      %s119 = sphi 0, %s118
      %s135 = sphi 0, %s119
    $region4: #{tpu_custom_call.1} parent=1 // loop_header_branch
      %19 = sbr.rel (%p17) target = $region8
    $region5: #{tpu_custom_call.1} parent=1 // loop_body
      %s21 = ssub.s32 %s16, 1
      %s22 = ssub.s32 %s16, 2
      %s29 = sadd.s32 1, %s24
      %p30 = scmp.ge.s32.totalorder %s29, 1
      %s31 = scalar_select %p30, 0, %s29
      %s32 = sadd.s32 1, %s23
      %s33 = scalar_select %p30, %s32, %s23
      %p34 = scmp.ge.s32.totalorder %s33, 2
      %s35 = scalar_select %p34, 0, %s33
      %s36 = ssub.s32 %s23, %s35
      %s37 = ssub.s32 %s24, %s31
      %s38 = sor.u32 %s36, %s37
      %p39 = scmp.eq.s32.totalorder %s38, 0
      %s41 = sadd.s32 %s40, 1
      %s42 = scalar_select %p39, %s40, %s41
      %p45 = pneg %p39
      %p46 = scmp.eq.s32.totalorder %s16, 1
      %p47 = por %p45, %p46
      %p48 = scmp.ne.s32.totalorder %s40, %s43
      %p49 = scmp.eq.s32.totalorder %s16, 0
      %p50 = por %p48, %p49
      %p51 = scmp.ne.s32.totalorder %s40, %s43
      %p52 = scmp.eq.s32.totalorder %s21, 1
      %p53 = por %p51, %p52
      %p54 = scmp.ne.s32.totalorder %s43, %s44
      %p55 = scmp.eq.s32.totalorder %s21, 0
      %p56 = por %p54, %p55
      %p57 = scmp.ne.s32.totalorder %s43, %s44
      %p58 = scmp.eq.s32.totalorder %s22, 1
      %p59 = por %p57, %p58
      %p61 = scmp.ne.s32.totalorder %s44, %s60
      %p62 = scmp.eq.s32.totalorder %s22, 0
      %p63 = por %p61, %p62
      %s65 = sadd.s32 %s64, 1
      %p68 = scmp.eq.s32.totalorder %s16, 1
      %p69 = scmp.ne.s32.totalorder %s64, %s66
      %p70 = scmp.eq.s32.totalorder %s16, 0
      %p71 = por %p69, %p70
      %p72 = scmp.ne.s32.totalorder %s64, %s66
      %p73 = scmp.eq.s32.totalorder %s21, 1
      %p74 = por %p72, %p73
      %p75 = scmp.ne.s32.totalorder %s66, %s67
      %p76 = scmp.eq.s32.totalorder %s21, 0
      %p77 = por %p75, %p76
      %p78 = scmp.ne.s32.totalorder %s66, %s67
      %p79 = scmp.eq.s32.totalorder %s22, 1
      %p80 = por %p78, %p79
      %p82 = scmp.ne.s32.totalorder %s67, %s81
      %p83 = scmp.eq.s32.totalorder %s22, 0
      %p84 = por %p82, %p83
      %s85 = ssub.s32 %s23, %s35
      %p86 = scmp.eq.s32.totalorder %s85, 0
      %s88 = sadd.s32 %s87, 1
      %s89 = scalar_select %p86, %s87, %s88
      %p92 = pneg %p86
      %p93 = scmp.eq.s32.totalorder %s16, 1
      %p94 = por %p92, %p93
      %p95 = scmp.ne.s32.totalorder %s87, %s90
      %p96 = scmp.eq.s32.totalorder %s16, 0
      %p97 = por %p95, %p96
      %p98 = scmp.ne.s32.totalorder %s87, %s90
      %p99 = scmp.eq.s32.totalorder %s21, 1
      %p100 = por %p98, %p99
      %p101 = scmp.ne.s32.totalorder %s90, %s91
      %p102 = scmp.eq.s32.totalorder %s21, 0
      %p103 = por %p101, %p102
      %p104 = scmp.ne.s32.totalorder %s90, %s91
      %p105 = scmp.eq.s32.totalorder %s22, 1
      %p106 = por %p104, %p105
      %p108 = scmp.ne.s32.totalorder %s91, %s107
      %p109 = scmp.eq.s32.totalorder %s22, 0
      %p110 = por %p108, %p109
      %s111 = ssub.s32 %s23, %s35
      %s112 = ssub.s32 %s24, %s31
      %s113 = sor.u32 %s111, %s112
      %p114 = scmp.eq.s32.totalorder %s113, 0
      %s116 = sadd.s32 %s115, 1
      %s117 = scalar_select %p114, %s115, %s116
      %p120 = pneg %p114
      %p121 = scmp.eq.s32.totalorder %s16, 1
      %p122 = por %p120, %p121
      %p123 = scmp.ne.s32.totalorder %s115, %s118
      %p124 = scmp.eq.s32.totalorder %s16, 0
      %p125 = por %p123, %p124
      %p126 = scmp.ne.s32.totalorder %s115, %s118
      %p127 = scmp.eq.s32.totalorder %s21, 1
      %p128 = por %p126, %p127
      %p129 = scmp.ne.s32.totalorder %s118, %s119
      %p130 = scmp.eq.s32.totalorder %s21, 0
      %p131 = por %p129, %p130
      %p132 = scmp.ne.s32.totalorder %s118, %s119
      %p133 = scmp.eq.s32.totalorder %s22, 1
      %p134 = por %p132, %p133
      %p136 = scmp.ne.s32.totalorder %s119, %s135
      %p137 = scmp.eq.s32.totalorder %s22, 0
      %p138 = por %p136, %p137
      %p139 = scmp.le.s32.totalorder 1, %s16
      %p140 = scmp.lt.s32.totalorder %s16, 3
      %p141 = pnand %p139, %p140
      %p142 = pneg %p141
      // Predicated region
      $region9: #{tpu_custom_call.1} parent=5 // pred_check
        _
      $region10: #{tpu_custom_call.1} parent=5 // pred_check_branch
        %144 = sbr.rel (%p141) target = $region12
      $region11: #{tpu_custom_call.1} parent=5 // pred_region
        %s145 = ssub.s32 %s16, 1
        // Predicated region
        $region13: #{tpu_custom_call.1} parent=11 // pred_check
          %p146 = pneg %p77
        $region14: #{tpu_custom_call.1} parent=11 // pred_check_branch
          %148 = sbr.rel (%p146) target = $region16
        $region15: #{tpu_custom_call.1} parent=11 // pred_region
          %s150 = ssub.s32 256, 256
          %151 = vsyncadd [#allocation6], %s150
          %s152 = sshll.u32 [#allocation5], 4
          %s153 = int_to_ptr.vmem [resolvable:$true] %s152
          %158 = dma.hbm_to_vmem [thread:$0]  %s1, 256, %s153, [#allocation6], 64, 64, 4
        $region16: #{tpu_custom_call.1} parent=11 // pred_fallthru
          _
      $region12: #{tpu_custom_call.1} parent=5 // pred_fallthru
        _
      %p159 = scmp.lt.s32.totalorder %s16, 2
      // Predicated region
      $region17: #{tpu_custom_call.1} parent=5 // pred_check
        %p160 = pneg %p159
      $region18: #{tpu_custom_call.1} parent=5 // pred_check_branch
        %162 = sbr.rel (%p160) target = $region20
      $region19: #{tpu_custom_call.1} parent=5 // pred_region
        // Predicated region
        $region21: #{tpu_custom_call.1} parent=19 // pred_check
          %p163 = pneg %p50
        $region22: #{tpu_custom_call.1} parent=19 // pred_check_branch
          %165 = sbr.rel (%p163) target = $region24
        $region23: #{tpu_custom_call.1} parent=19 // pred_region
          %s166 = sand.u32 %s40, 1
          %s167 = scalar_lea.sflag [#allocation3], %s166
          %s168 = sand.u32 %s40, 1
          %s169 = smul.addr %s168, 4
          %s170 = scalar_lea.vmem [#allocation2], %s169
          %s172 = ssub.s32 64, 64
          %173 = vsyncadd %s167, %s172
          %s174 = sadd.s32 %s24, %s23
          %s175 = smul.addr %s174, 64
          %s176 = scalar_lea.hbm %s0, %s175
          %s178 = sshll.u32 %s170, 4
          %s179 = int_to_ptr.vmem [resolvable:$true] %s178
          %181 = dma.hbm_to_vmem [thread:$0]  %s176, 64, %s179, %s167
        $region24: #{tpu_custom_call.1} parent=19 // pred_fallthru
          _
        // Predicated region
        $region25: #{tpu_custom_call.1} parent=19 // pred_check
          %p182 = pneg %p97
        $region26: #{tpu_custom_call.1} parent=19 // pred_check_branch
          %184 = sbr.rel (%p182) target = $region28
        $region27: #{tpu_custom_call.1} parent=19 // pred_region
          %p185 = scmp.lt.s32.totalorder %s23, 1
          %s186 = scalar_select %p185, %s23, 1
          %s187 = smul.addr %s186, 2
          %s188 = scalar_lea.vmem %s2, %s187
        $region28: #{tpu_custom_call.1} parent=19 // pred_fallthru
          _
      $region20: #{tpu_custom_call.1} parent=5 // pred_fallthru
        _
      %p189 = scmp.le.s32.totalorder 1, %s16
      %p190 = scmp.lt.s32.totalorder %s16, 3
      %p191 = pnand %p189, %p190
      %p192 = pneg %p191
      // Predicated region
      $region29: #{tpu_custom_call.1} parent=5 // pred_check
        _
      $region30: #{tpu_custom_call.1} parent=5 // pred_check_branch
        %194 = sbr.rel (%p191) target = $region32
      $region31: #{tpu_custom_call.1} parent=5 // pred_region
        %s195 = ssub.s32 %s16, 1
        %s196 = sand.u32 %s43, 1
        %s197 = scalar_lea.sflag [#allocation3], %s196
        %s198 = sand.u32 %s43, 1
        %s199 = smul.addr %s198, 4
        %s200 = scalar_lea.vmem [#allocation2], %s199
        // Predicated region
        $region33: #{tpu_custom_call.1} parent=31 // pred_check
          %p201 = pneg %p56
        $region34: #{tpu_custom_call.1} parent=31 // pred_check_branch
          %203 = sbr.rel (%p201) target = $region36
        $region35: #{tpu_custom_call.1} parent=31 // pred_region
          %204 = dma.done %s197, 64
        $region36: #{tpu_custom_call.1} parent=31 // pred_fallthru
          _
        // Predicated region
        $region37: #{tpu_custom_call.1} parent=31 // pred_check
          %p205 = pneg %p77
        $region38: #{tpu_custom_call.1} parent=31 // pred_check_branch
          %207 = sbr.rel (%p205) target = $region40
        $region39: #{tpu_custom_call.1} parent=31 // pred_region
          %208 = dma.done [#allocation6], 256
        $region40: #{tpu_custom_call.1} parent=31 // pred_fallthru
          _
        %s209 = sand.u32 %s43, 1
        %s210 = scalar_lea.sflag [#allocation3], %s209
        %s211 = sand.u32 %s43, 1
        %s212 = smul.addr %s211, 4
        %s213 = scalar_lea.vmem [#allocation2], %s212
        %p214 = pneg %p56
        %p215 = pneg %p53
        %p216 = pneg %p77
        %p217 = pneg %p74
        %p218 = scmp.lt.s32.totalorder %s25, 1
        %s219 = scalar_select %p218, %s25, 1
        %s220 = smul.addr %s219, 2
        %s221 = scalar_lea.vmem %s2, %s220
        %p222 = pneg %p103
        %p223 = pneg %p100
        %p224 = pneg %p131
        %p225 = pneg %p128
        %s226 = sand.u32 %s118, 1
        %s227 = scalar_lea.sflag [#allocation4], %s226
        %s228 = sand.u32 %s118, 1
        %s229 = smul.addr %s228, 8
        %s230 = scalar_lea.vmem [#allocation7], %s229
        %p231 = scmp.lt.s32.totalorder %s25, 1
        %s232 = scalar_select %p231, %s25, 1
        %s233 = smul.addr %s232, 2
        %s234 = scalar_lea.vmem %s2, %s233
        %v236 = vld [vmem:[#allocation5] sm:$0xf]
        %v237 = vld [vmem:[#allocation5 + $0x4] sm:$0xf]
        %v238 = vld [vmem:[#allocation5 + $0x8] sm:$0xf]
        %v239 = vld [vmem:[#allocation5 + $0xc] sm:$0xf]
        %v240 = vld [vmem:[%s234] sm:$0x1]
        %v241 = vld [vmem:[%s234 + $0x1] sm:$0x1]
        %v242 = vld [vmem:[%s200] sm:$0xf]
        %v247 = vunpack.c.l.b16 %v236
        %v248 = vunpack.c.l.b16 %v237
        %v249 = vunpack.c.l.b16 %v238
        %v250 = vunpack.c.l.b16 %v239
        %v251 = vpack.c.b16 %v248, %v247
        %v252 = vpack.c.b16 %v250, %v249
        %vm255 = vcmask 261120
        %v257 = vsel %vm255, %v242, 0
        %259 = vmatprep.subr.bf16.mxu0 0
        %260 = vmatpush1.bf16.msra.mxu0 %v251
        %261 = vmatprep.subr.bf16.mxu0 0
        %262 = vmatpush1.bf16.msra.mxu0 %v252
        %263 = vmatprep.subr.bf16.mxu0 0
        %264 = vmatpush1.bf16.msra.mxu0 0
        %265 = vmatprep.subr.bf16.mxu0 0
        %266 = vmatpush1.bf16.msra.mxu0 0
        %267 = vmatprep.subr.bf16.mxu0 0
        %268 = vmatpush1.bf16.msra.mxu0 0
        %269 = vmatprep.subr.bf16.mxu0 0
        %270 = vmatpush1.bf16.msra.mxu0 0
        %271 = vmatprep.subr.bf16.mxu0 0
        %272 = vmatpush1.bf16.msra.mxu0 0
        %273 = vmatprep.subr.bf16.mxu0 0
        %274 = vmatpush1.bf16.msra.mxu0 0
        %275 = vmatprep.subr.bf16.mxu0 0
        %276 = vmatpush1.bf16.msra.mxu0 0
        %277 = vmatprep.subr.bf16.mxu0 0
        %278 = vmatpush1.bf16.msra.mxu0 0
        %279 = vmatprep.subr.bf16.mxu0 0
        %280 = vmatpush1.bf16.msra.mxu0 0
        %281 = vmatprep.subr.bf16.mxu0 0
        %282 = vmatpush1.bf16.msra.mxu0 0
        %283 = vmatprep.subr.bf16.mxu0 0
        %284 = vmatpush1.bf16.msra.mxu0 0
        %285 = vmatprep.subr.bf16.mxu0 0
        %286 = vmatpush1.bf16.msra.mxu0 0
        %287 = vmatprep.subr.bf16.mxu0 0
        %288 = vmatpush1.bf16.msra.mxu0 0
        %289 = vmatprep.subr.bf16.mxu0 0
        %290 = vmatpush1.bf16.msra.mxu0 0
        %291 = vmatprep.mubr.bf16.mxu0 0
        %292 = vmatmul.mubr.bf16.gmra.mrb[0].mxu0 %v257
        %v293 = vpop.f32.mrb[0].mxu0
        %v294 = vadd.f32 0.0, %v293
        %v295 = vpop.f32.mrb[0].mxu0
        %v296 = vpop.f32.mrb[0].mxu0
        %v297 = vpop.f32.mrb[0].mxu0
        %298 = vdwg.mxu0
        %v299 = vlaneseq
        %v300 = vshrl.u32 %v299, 7
        %v301 = vsub.s32 0, %v300
        %v302 = vrot.slane %v240, %v301
        %v303 = vmul.f32 %v294, %v302
        %v304 = vlaneseq
        %v305 = vshrl.u32 %v304, 7
        %v306 = vsub.s32 0, %v305
        %v307 = vrot.slane %v241, %v306
        %v308 = vadd.f32 %v303, %v307
        %309 = vst.msk [vmem:[%s230] sm:$0xff] %vm255, %v308
        %s310 = sand.u32 %s118, 1
        %s311 = scalar_lea.sflag [#allocation4], %s310
        %s312 = sand.u32 %s118, 1
        %s313 = smul.addr %s312, 8
        %s314 = scalar_lea.vmem [#allocation7], %s313
        // Predicated region
        $region41: #{tpu_custom_call.1} parent=31 // pred_check
          %p315 = pneg %p128
        $region42: #{tpu_custom_call.1} parent=31 // pred_check_branch
          %317 = sbr.rel (%p315) target = $region44
        $region43: #{tpu_custom_call.1} parent=31 // pred_region
          %s319 = ssub.s32 128, 128
          %320 = vsyncadd %s311, %s319
          %s321 = sadd.s32 %s26, %s25
          %s322 = smul.addr %s321, 128
          %s323 = scalar_lea.hbm %s3, %s322
          %s325 = sshll.u32 %s314, 4
          %s326 = int_to_ptr.vmem [resolvable:$true] %s325
          %328 = dma.vmem_to_hbm [thread:$0]  %s326, 128, %s323, %s311
        $region44: #{tpu_custom_call.1} parent=31 // pred_fallthru
          _
      $region32: #{tpu_custom_call.1} parent=5 // pred_fallthru
        _
      %p329 = scmp.le.s32.totalorder 2, %s16
      // Predicated region
      $region45: #{tpu_custom_call.1} parent=5 // pred_check
        %p330 = pneg %p329
      $region46: #{tpu_custom_call.1} parent=5 // pred_check_branch
        %332 = sbr.rel (%p330) target = $region48
      $region47: #{tpu_custom_call.1} parent=5 // pred_region
        %s333 = ssub.s32 %s16, 2
        // Predicated region
        $region49: #{tpu_custom_call.1} parent=47 // pred_check
          %p334 = pneg %p134
        $region50: #{tpu_custom_call.1} parent=47 // pred_check_branch
          %336 = sbr.rel (%p334) target = $region52
        $region51: #{tpu_custom_call.1} parent=47 // pred_region
          %s337 = sand.u32 %s119, 1
          %s338 = scalar_lea.sflag [#allocation4], %s337
          %s339 = sand.u32 %s119, 1
          %s340 = smul.addr %s339, 8
          %s341 = scalar_lea.vmem [#allocation7], %s340
          %342 = dma.done %s338, 128
        $region52: #{tpu_custom_call.1} parent=47 // pred_fallthru
          _
      $region48: #{tpu_custom_call.1} parent=5 // pred_fallthru
        _
    $region6: #{tpu_custom_call.1} parent=1 // loop_footer
      %s20 = sadd.s32 1, %s16
    $region7: #{tpu_custom_call.1} parent=1 // loop_footer_branch
      %15 = sbr.rel target = $region3
    $region8: #{tpu_custom_call.1} parent=1 // loop_exit
      _
    %343 = vsyncpa [#allocation3], 1
    %s344 = scalar_lea.sflag [#allocation3], 1
    %345 = vsyncpa %s344, 1
    %346 = vsyncpa [#allocation6], 1
    %347 = vsyncpa [#allocation4], 1
    %s348 = scalar_lea.sflag [#allocation4], 1
    %349 = vsyncpa %s348, 1

</llo_original>
